<compile_context>
chip_gen: v7x
topology: tpu7x:2x2x1
jax: 0.10.0
libtpu: 0.0.40
codegen_flags: <defaults>
</compile_context>

<pallas_src>
import jax
import jax.numpy as jnp
from jax import lax
from jax.experimental import pallas as pl
from jax.experimental.pallas import tpu as pltpu


def _round_up(x, m):
    return (x + m - 1) // m * m


def _make_kernel(d_real):
    """d_real: static column index in the padded z where the ones/degree column lives."""

    def kernel(sd_ref, z_ref, w_ref, b_ref, o_ref, acc_ref):
        e = pl.program_id(1)

        @pl.when(e == 0)
        def _init():
            acc_ref[...] = jnp.zeros_like(acc_ref)

        tN = acc_ref.shape[0]
        tE = z_ref.shape[0]
        n_base = pl.program_id(0) * tN

        # Shift the small (1, tE) edge-index rows instead of the (tN, tE) iota:
        # one fewer full-size VALU op per step (VALU is the saturating VLIW slot).
        sd = sd_ref[...]                      # (2, tE) int32, sentinel -1 for padded edges
        src_rel = sd[0:1, :] - n_base
        dst_rel = sd[1:2, :] - n_base

        node_ids = lax.broadcasted_iota(jnp.int32, (tN, tE), 0)

        # Incidence tile M[n, e] = [src==n] + [dst==n], cast straight to the compute
        # dtype (0/1/2 exact in bf16); padded edges never match, contributing 0 to both
        # the aggregation and the degree.  (v5e has no bf16 VALU; the single bf16 add
        # here is still cheaper than the previous int32 add + extra converts.)
        m = ((node_ids == src_rel).astype(z_ref.dtype)
             + (node_ids == dst_rel).astype(z_ref.dtype))

        # Scatter-add and degree (ones column of z) in one bf16 MXU pass, f32 accumulate.
        acc_ref[...] += jnp.dot(m, z_ref[...], preferred_element_type=jnp.float32)

        @pl.when(e == pl.num_programs(1) - 1)
        def _finalize():
            acc = acc_ref[...]
            deg = jnp.maximum(acc[:, d_real:d_real + 1], 1.0)   # bincount, clamp(min=1)
            agg = acc / deg                                     # exact divide, once per N-tile
            # Padded rows of W^T are zero, so the deg column / pad columns drop out here.
            o_ref[...] = (
                jnp.dot(agg, w_ref[...], preferred_element_type=jnp.float32) + b_ref[...]
            ).astype(o_ref.dtype)

    return kernel


def feature_decoder(z_uv, edge_index, num_nodes, weight, bias,
                    *, tile_n=1024, tile_e=2048):
    """z_uv: [E, D]; edge_index: [2, E] int; weight: [F_out, D]; bias: [F_out].

    Returns [num_nodes, F_out] float32 (== PyTorch FeatureDecoder.forward).
    """
    E, D = z_uv.shape
    F_out = weight.shape[0]
    N = num_nodes

    # bf16 for the streamed operand and the incidence tile: halves HBM/VMEM traffic on
    # the dominant streamed operand and uses the fast bf16 MXU path; acc stays f32.
    compute_dtype = jnp.bfloat16

    # ---- pad everything to lane-dense / tile-aligned shapes ------------------
    D_pad = _round_up(D + 1, 128)          # +1 for the ones/degree column
    F_pad = _round_up(F_out, 128)

    tN = min(tile_n, _round_up(N, 8))
    # v7x megacore: keep >= 2 N-tiles when the graph is big enough to split, so the
    # "parallel" N axis can shard across both TensorCores.
    if _round_up(N, tN) == tN and N > 8:
        tN = max(8, _round_up((N + 1) // 2, 8))
    N_pad = _round_up(N, tN)

    tE = min(tile_e, _round_up(E, 128))
    E_pad = _round_up(E, tE)

    # Packed (2, E_pad) edge index (single BlockSpec / small DMA per step); padded
    # edges get sentinel -1 so they never match a (non-negative) node id.
    ei = jnp.asarray(edge_index, dtype=jnp.int32)
    src_dst = jnp.pad(ei, ((0, 0), (0, E_pad - E)), constant_values=-1)

    # z with appended ones column, emitted directly in bf16 with one concat + one pad.
    z_body = jnp.concatenate(
        [z_uv.astype(compute_dtype), jnp.ones((E, 1), compute_dtype)], axis=1)
    z_pad = jnp.pad(z_body, ((0, E_pad - E), (0, D_pad - (D + 1))))

    w_pad = jnp.zeros((D_pad, F_pad), jnp.float32)
    w_pad = w_pad.at[:D, :F_out].set(weight.T.astype(jnp.float32))
    b_pad = jnp.zeros((1, F_pad), jnp.float32)
    b_pad = b_pad.at[0, :F_out].set(bias.astype(jnp.float32))

    grid = (N_pad // tN, E_pad // tE)

    out = pl.pallas_call(
        _make_kernel(D),
        out_shape=jax.ShapeDtypeStruct((N_pad, F_pad), jnp.float32),
        grid_spec=pltpu.PrefetchScalarGridSpec(
            num_scalar_prefetch=0,
            grid=grid,
            in_specs=[
                pl.BlockSpec((2, tE), lambda i, e: (0, e)),        # src/dst packed
                pl.BlockSpec((tE, D_pad), lambda i, e: (e, 0)),    # z (+ ones col), bf16
                pl.BlockSpec((D_pad, F_pad), lambda i, e: (0, 0)), # W^T  (resident)
                pl.BlockSpec((1, F_pad), lambda i, e: (0, 0)),     # bias (resident)
            ],
            out_specs=pl.BlockSpec((tN, F_pad), lambda i, e: (i, 0)),
            scratch_shapes=[pltpu.VMEM((tN, D_pad), jnp.float32)],
        ),
        compiler_params=pltpu.CompilerParams(
            dimension_semantics=("parallel", "arbitrary"),
            # Sized against v7x's 64 MiB/TC physical VMEM: M tile + iota/compare
            # intermediates + double-buffered z + acc + out stay well below this.
            vmem_limit_bytes=48 * 1024 * 1024,
        ),
    )(src_dst, z_pad, w_pad, b_pad)

    return out[:N, :F_out]


def _reference(z_uv, edge_index, num_nodes, weight, bias):
    src, dst = edge_index[0], edge_index[1]
    agg = jnp.zeros((num_nodes, z_uv.shape[1]), jnp.float32)
    agg = agg.at[src].add(z_uv.astype(jnp.float32))
    agg = agg.at[dst].add(z_uv.astype(jnp.float32))
    deg = jnp.bincount(jnp.concatenate([src, dst]), length=num_nodes).astype(jnp.float32)
    deg = jnp.clip(deg, 1.0, None)[:, None]
    agg = agg / deg
    return agg @ weight.T.astype(jnp.float32) + bias[None, :].astype(jnp.float32)


if __name__ == "__main__":
    key = jax.random.PRNGKey(0)
    k_z, k_e, k_w, k_b = jax.random.split(key, 4)

    num_nodes = 8
    num_edges = 16
    edge_latent_dim = 32
    out_features = 16

    z_uv = jax.random.normal(k_z, (num_edges, edge_latent_dim), dtype=jnp.float32)
    edge_index = jax.random.randint(k_e, (2, num_edges), 0, num_nodes, dtype=jnp.int32)

    # Deterministic Linear(edge_latent_dim, out_features) params.
    bound = 1.0 / (edge_latent_dim ** 0.5)
    weight = jax.random.uniform(
        k_w, (out_features, edge_latent_dim), minval=-bound, maxval=bound, dtype=jnp.float32
    )
    bias = jax.random.uniform(
        k_b, (out_features,), minval=-bound, maxval=bound, dtype=jnp.float32
    )

    out = feature_decoder(z_uv, edge_index, num_nodes, weight, bias)
    out = jax.block_until_ready(out)

    ref = _reference(z_uv, edge_index, num_nodes, weight, bias)
    assert out.shape == (num_nodes, out_features)
    # Tolerance reflects the bf16 cast of z on the streamed/aggregated path (~3e-3 rel);
    # the degree division and the final Linear run in exact f32.
    assert jnp.allclose(out, ref, atol=2e-2, rtol=2e-2), float(jnp.max(jnp.abs(out - ref)))

    print("KERNEL_OK")
</pallas_src>

<mosaic_0001>
module attributes {stable_mosaic.version = 11 : i64} {
  func.func @kernel(%arg0: i32, %arg1: i32, %arg2: memref<2x128xi32, #tpu.memory_space<vmem>>, %arg3: memref<128x128xbf16, #tpu.memory_space<vmem>>, %arg4: memref<128x128xf32, #tpu.memory_space<vmem>>, %arg5: memref<1x128xf32, #tpu.memory_space<vmem>>, %arg6: memref<8x128xf32, #tpu.memory_space<vmem>>, %arg7: memref<8x128xf32, #tpu.memory_space<vmem>>) attributes {dimension_semantics = [#tpu.dimension_semantics<parallel>, #tpu.dimension_semantics<arbitrary>], iteration_bounds = array<i64: 1, 1>, scalar_prefetch = 0 : i64, scratch_operands = 1 : i64, tpu.core_type = #tpu.core_type<tc>, window_params = [{transform_indices = @transform_0, window_bounds = array<i64: 2, 128>}, {transform_indices = @transform_1, window_bounds = array<i64: 128, 128>}, {pipeline_mode = #tpu.pipeline_mode<synchronous>, transform_indices = @transform_2, window_bounds = array<i64: 128, 128>}, {pipeline_mode = #tpu.pipeline_mode<synchronous>, transform_indices = @transform_3, window_bounds = array<i64: 1, 128>}, {transform_indices = @transform_4, window_bounds = array<i64: 8, 128>}]} {
    %c0_i32 = arith.constant 0 : i32
    %0 = arith.cmpi eq, %arg1, %c0_i32 : i32
    %1 = arith.extui %0 : i1 to i32
    %c0_i32_0 = arith.constant 0 : i32
    %2 = arith.cmpi ne, %1, %c0_i32_0 : i32
    scf.if %2 {
      %cst_10 = arith.constant 0.000000e+00 : f32
      %31 = vector.broadcast %cst_10 : f32 to vector<8x128xf32>
      %c0_11 = arith.constant 0 : index
      %c0_12 = arith.constant 0 : index
      %32 = vector.load %arg7[%c0_11, %c0_12] : memref<8x128xf32, #tpu.memory_space<vmem>>, vector<8x128xf32>
      tpu.vector_store %arg7[%c0_11, %c0_12], %31 {strides = array<i32>} : memref<8x128xf32, #tpu.memory_space<vmem>>, vector<8x128xf32>,
    } else {
    }
    %c8_i32 = arith.constant 8 : i32
    %3 = arith.muli %arg0, %c8_i32 : i32
    %c0 = arith.constant 0 : index
    %c0_1 = arith.constant 0 : index
    %4 = vector.load %arg2[%c0, %c0_1] : memref<2x128xi32, #tpu.memory_space<vmem>>, vector<2x128xi32>
    %5 = vector.extract_strided_slice %4 {offsets = [0, 0], sizes = [1, 128], strides = [1, 1]} : vector<2x128xi32> to vector<1x128xi32>
    %6 = vector.broadcast %3 : i32 to vector<1x128xi32>
    %7 = arith.subi %5, %6 : vector<1x128xi32>
    %8 = vector.extract_strided_slice %4 {offsets = [1, 0], sizes = [1, 128], strides = [1, 1]} : vector<2x128xi32> to vector<1x128xi32>
    %9 = vector.broadcast %3 : i32 to vector<1x128xi32>
    %10 = arith.subi %8, %9 : vector<1x128xi32>
    %11 = tpu.iota {dimensions = array<i32: 0>} : vector<8x128xi32>
    %12 = vector.broadcast %7 : vector<1x128xi32> to vector<8x128xi32>
    %13 = arith.cmpi eq, %11, %12 : vector<8x128xi32>
    %14 = arith.extui %13 : vector<8x128xi1> to vector<8x128xi32>
    %15 = arith.sitofp %14 : vector<8x128xi32> to vector<8x128xf32>
    %16 = arith.truncf %15 : vector<8x128xf32> to vector<8x128xbf16>
    %17 = vector.broadcast %10 : vector<1x128xi32> to vector<8x128xi32>
    %18 = arith.cmpi eq, %11, %17 : vector<8x128xi32>
    %19 = arith.extui %18 : vector<8x128xi1> to vector<8x128xi32>
    %20 = arith.sitofp %19 : vector<8x128xi32> to vector<8x128xf32>
    %21 = arith.truncf %20 : vector<8x128xf32> to vector<8x128xbf16>
    %22 = arith.addf %16, %21 : vector<8x128xbf16>
    %c0_2 = arith.constant 0 : index
    %c0_3 = arith.constant 0 : index
    %23 = vector.load %arg7[%c0_2, %c0_3] : memref<8x128xf32, #tpu.memory_space<vmem>>, vector<8x128xf32>
    %c0_4 = arith.constant 0 : index
    %c0_5 = arith.constant 0 : index
    %24 = vector.load %arg3[%c0_4, %c0_5] : memref<128x128xbf16, #tpu.memory_space<vmem>>, vector<128x128xbf16>
    %cst = arith.constant dense<0.000000e+00> : vector<8x128xf32>
    %25 = tpu.matmul %22, %24, %cst {dimension_numbers = #tpu.dot_dimension_numbers<[1], [0], [0], [1], [0, 0, 1, 1], [], []>} : vector<8x128xbf16>, vector<128x128xbf16>, vector<8x128xf32> -> vector<8x128xf32>
    %26 = arith.addf %23, %25 : vector<8x128xf32>
    %c0_6 = arith.constant 0 : index
    %c0_7 = arith.constant 0 : index
    %27 = vector.load %arg7[%c0_6, %c0_7] : memref<8x128xf32, #tpu.memory_space<vmem>>, vector<8x128xf32>
    tpu.vector_store %arg7[%c0_6, %c0_7], %26 {strides = array<i32>} : memref<8x128xf32, #tpu.memory_space<vmem>>, vector<8x128xf32>,
    %c0_i32_8 = arith.constant 0 : i32
    %28 = arith.cmpi eq, %arg1, %c0_i32_8 : i32
    %29 = arith.extui %28 : i1 to i32
    %c0_i32_9 = arith.constant 0 : i32
    %30 = arith.cmpi ne, %29, %c0_i32_9 : i32
    scf.if %30 {
      %c0_10 = arith.constant 0 : index
      %c0_11 = arith.constant 0 : index
      %31 = vector.load %arg7[%c0_10, %c0_11] : memref<8x128xf32, #tpu.memory_space<vmem>>, vector<8x128xf32>
      %32 = vector.extract_strided_slice %31 {offsets = [0, 32], sizes = [8, 1], strides = [1, 1]} : vector<8x128xf32> to vector<8x1xf32>
      %cst_12 = arith.constant 1.000000e+00 : f32
      %33 = vector.broadcast %cst_12 : f32 to vector<8x1xf32>
      %34 = arith.maximumf %32, %33 : vector<8x1xf32>
      %35 = vector.broadcast %34 : vector<8x1xf32> to vector<8x128xf32>
      %36 = arith.divf %31, %35 : vector<8x128xf32>
      %c0_13 = arith.constant 0 : index
      %c0_14 = arith.constant 0 : index
      %37 = vector.load %arg4[%c0_13, %c0_14] : memref<128x128xf32, #tpu.memory_space<vmem>>, vector<128x128xf32>
      %cst_15 = arith.constant dense<0.000000e+00> : vector<8x128xf32>
      %38 = tpu.matmul %36, %37, %cst_15 {dimension_numbers = #tpu.dot_dimension_numbers<[1], [0], [0], [1], [0, 0, 1, 1], [], []>} : vector<8x128xf32>, vector<128x128xf32>, vector<8x128xf32> -> vector<8x128xf32>
      %c0_16 = arith.constant 0 : index
      %c0_17 = arith.constant 0 : index
      %39 = vector.load %arg5[%c0_16, %c0_17] : memref<1x128xf32, #tpu.memory_space<vmem>>, vector<1x128xf32>
      %40 = vector.broadcast %39 : vector<1x128xf32> to vector<8x128xf32>
      %41 = arith.addf %38, %40 : vector<8x128xf32>
      %c0_18 = arith.constant 0 : index
      %c0_19 = arith.constant 0 : index
      %42 = vector.load %arg6[%c0_18, %c0_19] : memref<8x128xf32, #tpu.memory_space<vmem>>, vector<8x128xf32>
      tpu.vector_store %arg6[%c0_18, %c0_19], %41 {strides = array<i32>} : memref<8x128xf32, #tpu.memory_space<vmem>>, vector<8x128xf32>,
    } else {
    }
    return
  }
  func.func @transform_0(%arg0: i32, %arg1: i32) -> (i32, i32) {
    %c0_i32 = arith.constant 0 : i32
    %c0_i32_0 = arith.constant 0 : i32
    return %c0_i32, %arg1 : i32, i32
  }
  func.func @transform_1(%arg0: i32, %arg1: i32) -> (i32, i32) {
    %c0_i32 = arith.constant 0 : i32
    %c0_i32_0 = arith.constant 0 : i32
    return %arg1, %c0_i32 : i32, i32
  }
  func.func @transform_2(%arg0: i32, %arg1: i32) -> (i32, i32) {
    %c0_i32 = arith.constant 0 : i32
    %c0_i32_0 = arith.constant 0 : i32
    %c0_i32_1 = arith.constant 0 : i32
    return %c0_i32, %c0_i32_0 : i32, i32
  }
  func.func @transform_3(%arg0: i32, %arg1: i32) -> (i32, i32) {
    %c0_i32 = arith.constant 0 : i32
    %c0_i32_0 = arith.constant 0 : i32
    %c0_i32_1 = arith.constant 0 : i32
    return %c0_i32, %c0_i32_0 : i32, i32
  }
  func.func @transform_4(%arg0: i32, %arg1: i32) -> (i32, i32) {
    %c0_i32 = arith.constant 0 : i32
    %c0_i32_0 = arith.constant 0 : i32
    return %arg0, %c0_i32 : i32, i32
  }
}

</mosaic_0001>

<llo_original>
// kernel: tpu_custom_call.1
$region0: #{tpu_custom_call.1}
  #allocation0 [shape = 'u32[]', space=smem, size = 0x4, offset = 0x4, fixed_abs, tag = 'smem constant byte address 0x4 - core index']
  #allocation1 [shape = 'u32[144,128]{1,0:T(1,128)}', space=vmem, size = 0x12000, scoped, tag = 'internal scratch']
  #allocation2 [shape = 'f32[8,128]{1,0:T(8,128)}', space=vmem, size = 0x1000, scoped, tag = 'scratch operand']
  %s0 = inlined_call_operand.hbm [shape: s32[2,128], index: 0, kind: input, shape index: {}]
  %s1 = inlined_call_operand.hbm [shape: bf16[128,128], index: 1, kind: input, shape index: {}]
  %s2 = inlined_call_operand.hbm [shape: f32[128,128], index: 2, kind: input, shape index: {}]
  %s3 = inlined_call_operand.vmem [shape: f32[1,128], index: 3, kind: input, shape index: {}]
  %s4 = inlined_call_operand.hbm [shape: f32[8,128], index: 4, kind: output, shape index: {}]
  %s5 = sld [smem:[#allocation0]]
  $region46: #{tpu_custom_call.1} parent=0
    _
  %s7 = ssub.s32 1, %s5
  %s8 = scalar_select 0, %s7, %s5
  $region1: #{tpu_custom_call.1} parent=0
    #allocation3 [shape = 'u8[1024]{0}', space=vmem, size = 0x400, scoped, tag = 'input window, operand 0, single buffered']
    #allocation4 [shape = 's32[1]{0}', space=sflag, size = 0x4, scoped, tag = 'scoped memory for tpu_custom_call.1']
    #allocation5 [shape = 's32[1]{0}', space=sflag, size = 0x4, scoped, tag = 'scoped memory for tpu_custom_call.1']
    #allocation6 [shape = 'u8[32768]{0}', space=vmem, size = 0x8000, scoped, tag = 'input window, operand 1, single buffered']
    #allocation7 [shape = 's32[1]{0}', space=sflag, size = 0x4, scoped, tag = 'scoped memory for tpu_custom_call.1']
    #allocation8 [shape = 'u8[65536]{0}', space=vmem, size = 0x10000, scoped, tag = 'input window, operand 2, single buffered']
    #allocation9 [shape = 'u8[4096]{0}', space=vmem, size = 0x1000, scoped, tag = 'output window, operand 0, single buffered']
    %9 = vsyncpa [#allocation4], 0
    %10 = vsyncpa [#allocation7], 0
    %11 = vsyncpa [#allocation5], 0
    // Predicated region
    $region2: #{tpu_custom_call.1} parent=1 // pred_check
      _
    $region3: #{tpu_custom_call.1} parent=1 // pred_check_branch
      %13 = sbr.rel (0) target = $region5
    $region4: #{tpu_custom_call.1} parent=1 // pred_region
      %s15 = ssub.s32 32, 32
      %16 = vsyncadd [#allocation4], %s15
      %s18 = sshll.u32 [#allocation3], 4
      %s19 = int_to_ptr.vmem [resolvable:$true] %s18
      %21 = dma.hbm_to_vmem [thread:$0]  %s0, 32, %s19, [#allocation4]
    $region5: #{tpu_custom_call.1} parent=1 // pred_fallthru
      _
    // Predicated region
    $region6: #{tpu_custom_call.1} parent=1 // pred_check
      _
    $region7: #{tpu_custom_call.1} parent=1 // pred_check_branch
      %23 = sbr.rel (0) target = $region9
    $region8: #{tpu_custom_call.1} parent=1 // pred_region
      %s25 = ssub.s32 1024, 1024
      %26 = vsyncadd [#allocation7], %s25
      %s27 = sshll.u32 [#allocation6], 4
      %s28 = int_to_ptr.vmem [resolvable:$true] %s27
      %33 = dma.hbm_to_vmem [thread:$0]  %s1, 1024, %s28, [#allocation7], 64, 64, 4
    $region9: #{tpu_custom_call.1} parent=1 // pred_fallthru
      _
    // Predicated region
    $region10: #{tpu_custom_call.1} parent=1 // pred_check
      _
    $region11: #{tpu_custom_call.1} parent=1 // pred_check_branch
      %35 = sbr.rel (0) target = $region13
    $region12: #{tpu_custom_call.1} parent=1 // pred_region
      %s37 = ssub.s32 2048, 2048
      %38 = vsyncadd [#allocation7], %s37
      %s39 = sshll.u32 [#allocation8], 4
      %s40 = int_to_ptr.vmem [resolvable:$true] %s39
      %45 = dma.hbm_to_vmem [thread:$0]  %s2, 2048, %s40, [#allocation7], 128, 128, 8
    $region13: #{tpu_custom_call.1} parent=1 // pred_fallthru
      _
    // Predicated region
    $region14: #{tpu_custom_call.1} parent=1 // pred_check
      _
    $region15: #{tpu_custom_call.1} parent=1 // pred_check_branch
      %47 = sbr.rel (0) target = $region17
    $region16: #{tpu_custom_call.1} parent=1 // pred_region
      _
    $region17: #{tpu_custom_call.1} parent=1 // pred_fallthru
      _
    // Predicated region
    $region18: #{tpu_custom_call.1} parent=1 // pred_check
      _
    $region19: #{tpu_custom_call.1} parent=1 // pred_check_branch
      %49 = sbr.rel (0) target = $region21
    $region20: #{tpu_custom_call.1} parent=1 // pred_region
      %50 = dma.done [#allocation4], 32
    $region21: #{tpu_custom_call.1} parent=1 // pred_fallthru
      _
    // Predicated region
    $region22: #{tpu_custom_call.1} parent=1 // pred_check
      _
    $region23: #{tpu_custom_call.1} parent=1 // pred_check_branch
      %52 = sbr.rel (0) target = $region25
    $region24: #{tpu_custom_call.1} parent=1 // pred_region
      %53 = dma.done [#allocation7], 1024
    $region25: #{tpu_custom_call.1} parent=1 // pred_fallthru
      _
    // Predicated region
    $region26: #{tpu_custom_call.1} parent=1 // pred_check
      _
    $region27: #{tpu_custom_call.1} parent=1 // pred_check_branch
      %55 = sbr.rel (0) target = $region29
    $region28: #{tpu_custom_call.1} parent=1 // pred_region
      %56 = dma.done [#allocation7], 2048
    $region29: #{tpu_custom_call.1} parent=1 // pred_fallthru
      _
    %p58 = scmp.eq.s32.totalorder 0, 0
    // Predicated region
    $region30: #{tpu_custom_call.1} parent=1 // pred_check
      %p59 = pneg %p58
    $region31: #{tpu_custom_call.1} parent=1 // pred_check_branch
      %61 = sbr.rel (%p59) target = $region33
    $region32: #{tpu_custom_call.1} parent=1 // pred_region
      %62 = vst [vmem:[#allocation2] sm:$0xff] 0.0
    $region33: #{tpu_custom_call.1} parent=1 // pred_fallthru
      _
    %s63 = smul.u32 0, 8
    %v64 = vld [vmem:[#allocation3] sm:$0x3]
    %v65 = vstv %s63
    %v66 = vsub.s32 %v64, %v65
    %v67 = vlaneseq
    %v68 = vshrl.u32 %v67, 7
    %v69 = vlaneseq
    %v70 = vshrl.u32 %v69, 7
    %v71 = vsub.s32 0, %v70
    %v72 = vrot.slane %v66, %v71
    %vm73 = vcmp.eq.s32.totalorder %v68, %v72
    %v74 = vsel %vm73, 1, 0
    %v75 = vcvt.s32.f32 %v74
    %v76 = vpack.c.bf16 %v75, %v75
    %v77 = vlaneseq
    %v78 = vshrl.u32 %v77, 7
    %v79 = vsub.s32 1, %v78
    %v80 = vrot.slane %v66, %v79
    %vm81 = vcmp.eq.s32.totalorder %v68, %v80
    %v82 = vsel %vm81, 1, 0
    %v83 = vcvt.s32.f32 %v82
    %v84 = vpack.c.bf16 %v83, %v83
    %v85 = vadd.bf16 %v76, %v84
    %v86 = vld [vmem:[#allocation2] sm:$0xff]
    %v87 = vld [vmem:[#allocation6] sm:$0xf]
    %v88 = vld [vmem:[#allocation6 + $0x4] sm:$0xf]
    %v89 = vld [vmem:[#allocation6 + $0x8] sm:$0xf]
    %v90 = vld [vmem:[#allocation6 + $0xc] sm:$0xf]
    %v91 = vld [vmem:[#allocation6 + $0x10] sm:$0xf]
    %v92 = vld [vmem:[#allocation6 + $0x14] sm:$0xf]
    %v93 = vld [vmem:[#allocation6 + $0x18] sm:$0xf]
    %v94 = vld [vmem:[#allocation6 + $0x1c] sm:$0xf]
    %v95 = vld [vmem:[#allocation6 + $0x20] sm:$0xf]
    %v96 = vld [vmem:[#allocation6 + $0x24] sm:$0xf]
    %v97 = vld [vmem:[#allocation6 + $0x28] sm:$0xf]
    %v98 = vld [vmem:[#allocation6 + $0x2c] sm:$0xf]
    %v99 = vld [vmem:[#allocation6 + $0x30] sm:$0xf]
    %v100 = vld [vmem:[#allocation6 + $0x34] sm:$0xf]
    %v101 = vld [vmem:[#allocation6 + $0x38] sm:$0xf]
    %v102 = vld [vmem:[#allocation6 + $0x3c] sm:$0xf]
    %v119 = vunpack.c.l.b16 %v87
    %v120 = vunpack.c.l.b16 %v88
    %v121 = vunpack.c.l.b16 %v89
    %v122 = vunpack.c.l.b16 %v90
    %v123 = vunpack.c.l.b16 %v91
    %v124 = vunpack.c.l.b16 %v92
    %v125 = vunpack.c.l.b16 %v93
    %v126 = vunpack.c.l.b16 %v94
    %v127 = vunpack.c.l.b16 %v95
    %v128 = vunpack.c.l.b16 %v96
    %v129 = vunpack.c.l.b16 %v97
    %v130 = vunpack.c.l.b16 %v98
    %v131 = vunpack.c.l.b16 %v99
    %v132 = vunpack.c.l.b16 %v100
    %v133 = vunpack.c.l.b16 %v101
    %v134 = vunpack.c.l.b16 %v102
    %v135 = vpack.c.b16 %v120, %v119
    %v136 = vpack.c.b16 %v122, %v121
    %v137 = vpack.c.b16 %v124, %v123
    %v138 = vpack.c.b16 %v126, %v125
    %v139 = vpack.c.b16 %v128, %v127
    %v140 = vpack.c.b16 %v130, %v129
    %v141 = vpack.c.b16 %v132, %v131
    %v142 = vpack.c.b16 %v134, %v133
    %151 = vmatprep.subr.bf16.mxu0 0
    %152 = vmatpush1.bf16.msra.mxu0 %v135
    %153 = vmatprep.subr.bf16.mxu0 0
    %154 = vmatpush1.bf16.msra.mxu0 %v136
    %155 = vmatprep.subr.bf16.mxu0 0
    %156 = vmatpush1.bf16.msra.mxu0 %v137
    %157 = vmatprep.subr.bf16.mxu0 0
    %158 = vmatpush1.bf16.msra.mxu0 %v138
    %159 = vmatprep.subr.bf16.mxu0 0
    %160 = vmatpush1.bf16.msra.mxu0 %v139
    %161 = vmatprep.subr.bf16.mxu0 0
    %162 = vmatpush1.bf16.msra.mxu0 %v140
    %163 = vmatprep.subr.bf16.mxu0 0
    %164 = vmatpush1.bf16.msra.mxu0 %v141
    %165 = vmatprep.subr.bf16.mxu0 0
    %166 = vmatpush1.bf16.msra.mxu0 %v142
    %167 = vmatprep.subr.bf16.mxu0 0
    %168 = vmatpush1.bf16.msra.mxu0 0
    %169 = vmatprep.subr.bf16.mxu0 0
    %170 = vmatpush1.bf16.msra.mxu0 0
    %171 = vmatprep.subr.bf16.mxu0 0
    %172 = vmatpush1.bf16.msra.mxu0 0
    %173 = vmatprep.subr.bf16.mxu0 0
    %174 = vmatpush1.bf16.msra.mxu0 0
    %175 = vmatprep.subr.bf16.mxu0 0
    %176 = vmatpush1.bf16.msra.mxu0 0
    %177 = vmatprep.subr.bf16.mxu0 0
    %178 = vmatpush1.bf16.msra.mxu0 0
    %179 = vmatprep.subr.bf16.mxu0 0
    %180 = vmatpush1.bf16.msra.mxu0 0
    %181 = vmatprep.subr.bf16.mxu0 0
    %182 = vmatpush1.bf16.msra.mxu0 0
    %183 = vmatprep.mubr.bf16.mxu0 0
    %184 = vmatmul.mubr.bf16.gmra.mrb[0].mxu0 %v85
    %v185 = vpop.f32.mrb[0].mxu0
    %v186 = vadd.f32 0.0, %v185
    %v187 = vpop.f32.mrb[0].mxu0
    %v188 = vpop.f32.mrb[0].mxu0
    %v189 = vpop.f32.mrb[0].mxu0
    %190 = vdwg.mxu0
    %v191 = vadd.f32 %v86, %v186
    %192 = vst [vmem:[#allocation2] sm:$0xff] %v191
    // Predicated region
    $region34: #{tpu_custom_call.1} parent=1 // pred_check
      %p193 = pneg %p58
    $region35: #{tpu_custom_call.1} parent=1 // pred_check_branch
      %195 = sbr.rel (%p193) target = $region37
    $region36: #{tpu_custom_call.1} parent=1 // pred_region
      %v196 = vld [vmem:[#allocation2] sm:$0xff]
      %v197 = vmax.f32 %v196, 1.0
      %199 = vset.pattern.permute.xlu0 32
      %200 = vperm.xlu0 %199, %v197
      %v201 = vpop.permute.xlu0 %200
      %v203 = vrcp.pop %v201
      %v204 = vmul.f32 %v196, %v203
      %v205 = vld [vmem:[#allocation8] sm:$0xff]
      %v206 = vld [vmem:[#allocation8 + $0x8] sm:$0xff]
      %v207 = vld [vmem:[#allocation8 + $0x10] sm:$0xff]
      %v208 = vld [vmem:[#allocation8 + $0x18] sm:$0xff]
      %v209 = vld [vmem:[#allocation8 + $0x20] sm:$0xff]
      %v210 = vld [vmem:[#allocation8 + $0x28] sm:$0xff]
      %v211 = vld [vmem:[#allocation8 + $0x30] sm:$0xff]
      %v212 = vld [vmem:[#allocation8 + $0x38] sm:$0xff]
      %v213 = vld [vmem:[#allocation8 + $0x40] sm:$0xff]
      %v214 = vld [vmem:[#allocation8 + $0x48] sm:$0xff]
      %v215 = vld [vmem:[#allocation8 + $0x50] sm:$0xff]
      %v216 = vld [vmem:[#allocation8 + $0x58] sm:$0xff]
      %v217 = vld [vmem:[#allocation8 + $0x60] sm:$0xff]
      %v218 = vld [vmem:[#allocation8 + $0x68] sm:$0xff]
      %v219 = vld [vmem:[#allocation8 + $0x70] sm:$0xff]
      %v220 = vld [vmem:[#allocation8 + $0x78] sm:$0xff]
      %v221 = vld [vmem:[%s3] sm:$0x1]
      %v223 = vlaneseq
      %v224 = vshrl.u32 %v223, 7
      %v225 = vsub.s32 0, %v224
      %v226 = vrot.slane %v221, %v225
      %228 = vmatprep.subr.mxu0 0.0
      %229 = vmatpush1.msra.mxu0 %v205
      %230 = vmatprep.subr.mxu0 0.0
      %231 = vmatpush1.msra.mxu0 %v206
      %232 = vmatprep.subr.mxu0 0.0
      %233 = vmatpush1.msra.mxu0 %v207
      %234 = vmatprep.subr.mxu0 0.0
      %235 = vmatpush1.msra.mxu0 %v208
      %236 = vmatprep.subr.mxu0 0.0
      %237 = vmatpush1.msra.mxu0 %v209
      %238 = vmatprep.subr.mxu0 0.0
      %239 = vmatpush1.msra.mxu0 %v210
      %240 = vmatprep.subr.mxu0 0.0
      %241 = vmatpush1.msra.mxu0 %v211
      %242 = vmatprep.subr.mxu0 0.0
      %243 = vmatpush1.msra.mxu0 %v212
      %244 = vmatprep.subr.mxu0 0.0
      %245 = vmatpush1.msra.mxu0 %v213
      %246 = vmatprep.subr.mxu0 0.0
      %247 = vmatpush1.msra.mxu0 %v214
      %248 = vmatprep.subr.mxu0 0.0
      %249 = vmatpush1.msra.mxu0 %v215
      %250 = vmatprep.subr.mxu0 0.0
      %251 = vmatpush1.msra.mxu0 %v216
      %252 = vmatprep.subr.mxu0 0.0
      %253 = vmatpush1.msra.mxu0 %v217
      %254 = vmatprep.subr.mxu0 0.0
      %255 = vmatpush1.msra.mxu0 %v218
      %256 = vmatprep.subr.mxu0 0.0
      %257 = vmatpush1.msra.mxu0 %v219
      %258 = vmatprep.subr.mxu0 0.0
      %259 = vmatpush1.msra.mxu0 %v220
      %260 = vmatprep.subr.mxu0 0.0
      %261 = vmatpush1.msra.mxu0 0.0
      %262 = vmatprep.subr.mxu0 0.0
      %263 = vmatpush1.msra.mxu0 0.0
      %264 = vmatprep.subr.mxu0 0.0
      %265 = vmatpush1.msra.mxu0 0.0
      %266 = vmatprep.subr.mxu0 0.0
      %267 = vmatpush1.msra.mxu0 0.0
      %268 = vmatprep.subr.mxu0 0.0
      %269 = vmatpush1.msra.mxu0 0.0
      %270 = vmatprep.subr.mxu0 0.0
      %271 = vmatpush1.msra.mxu0 0.0
      %272 = vmatprep.subr.mxu0 0.0
      %273 = vmatpush1.msra.mxu0 0.0
      %274 = vmatprep.subr.mxu0 0.0
      %275 = vmatpush1.msra.mxu0 0.0
      %276 = vmatprep.subr.mxu0 0.0
      %277 = vmatpush1.msra.mxu0 0.0
      %278 = vmatprep.subr.mxu0 0.0
      %279 = vmatpush1.msra.mxu0 0.0
      %280 = vmatprep.subr.mxu0 0.0
      %281 = vmatpush1.msra.mxu0 0.0
      %282 = vmatprep.subr.mxu0 0.0
      %283 = vmatpush1.msra.mxu0 0.0
      %284 = vmatprep.subr.mxu0 0.0
      %285 = vmatpush1.msra.mxu0 0.0
      %286 = vmatprep.subr.mxu0 0.0
      %287 = vmatpush1.msra.mxu0 0.0
      %288 = vmatprep.subr.mxu0 0.0
      %289 = vmatpush1.msra.mxu0 0.0
      %290 = vmatprep.subr.mxu0 0.0
      %291 = vmatpush1.msra.mxu0 0.0
      %292 = vmatprep.mubr.f32.mxu0 0.0
      %293 = vmatmul.mubr.f32.gmra.mrb[0].mxu0 %v204
      %v294 = vpop.f32.mrb[0].mxu0
      %v295 = vadd.f32 %v226, %v294
      %v296 = vpop.f32.mrb[0].mxu0
      %297 = vdwg.mxu0
      %298 = vst [vmem:[#allocation9] sm:$0xff] %v295
    $region37: #{tpu_custom_call.1} parent=1 // pred_fallthru
      _
    // Predicated region
    $region38: #{tpu_custom_call.1} parent=1 // pred_check
      _
    $region39: #{tpu_custom_call.1} parent=1 // pred_check_branch
      %300 = sbr.rel (0) target = $region41
    $region40: #{tpu_custom_call.1} parent=1 // pred_region
      %s302 = ssub.s32 128, 128
      %303 = vsyncadd [#allocation5], %s302
      %s305 = sshll.u32 [#allocation9], 4
      %s306 = int_to_ptr.vmem [resolvable:$true] %s305
      %308 = dma.vmem_to_hbm [thread:$0]  %s306, 128, %s4, [#allocation5]
    $region41: #{tpu_custom_call.1} parent=1 // pred_fallthru
      _
    // Predicated region
    $region42: #{tpu_custom_call.1} parent=1 // pred_check
      _
    $region43: #{tpu_custom_call.1} parent=1 // pred_check_branch
      %310 = sbr.rel (0) target = $region45
    $region44: #{tpu_custom_call.1} parent=1 // pred_region
      %311 = dma.done [#allocation5], 128
    $region45: #{tpu_custom_call.1} parent=1 // pred_fallthru
      _
    %312 = vsyncpa [#allocation4], 1
    %313 = vsyncpa [#allocation7], 1
    %314 = vsyncpa [#allocation5], 1

</llo_original>
